<compile_context>
chip_gen: v6e
topology: v6e:2x2x1
jax: 0.10.0
libtpu: 0.0.40
codegen_flags: <defaults>
</compile_context>

<pallas_src>
import functools

import jax
import jax.numpy as jnp
from jax.experimental import pallas as pl
from jax.experimental.pallas import tpu as pltpu

LANES = 128
SUBLANES = 8
MAX_BLOCK_BYTES = 8 * 1024 * 1024   # 8 MiB per input block
VMEM_LIMIT_BYTES = 40 << 20         # 2 inputs x 2 buffers x 8 MiB + slack


def _nrmse_single_kernel(x_ref, y_ref, loss_ref, *, inv_n, eps):
    """Whole array resident in one step: direct sums, no scratch."""
    x = x_ref[...].astype(jnp.float32)
    y = y_ref[...].astype(jnp.float32)
    d = x - y
    mse = jnp.sum(d * d) * inv_n
    mean_y2 = jnp.sum(y * y) * inv_n
    loss_ref[0] = jnp.sqrt(mse + eps) / jnp.sqrt(mean_y2)


def _nrmse_stream_kernel(x_ref, y_ref, loss_ref, acc_err, acc_y, *,
                         rows, block_rows, inv_n, eps, needs_mask):
    """Streams (block_rows, 128) tiles; accumulates (8, 128) f32 partials.

    x_ref, y_ref : (block_rows, 128) VMEM tiles (native dtype, cast in-kernel)
    loss_ref     : (1,) SMEM output -- the final scalar loss
    acc_err      : (8, 128) f32 VMEM partial sums of (x - y)^2
    acc_y        : (8, 128) f32 VMEM partial sums of y^2
    """
    i = pl.program_id(0)
    last = pl.num_programs(0) - 1

    @pl.when(i == 0)
    def _():
        acc_err[...] = jnp.zeros_like(acc_err)
        acc_y[...] = jnp.zeros_like(acc_y)

    def _accumulate(masked):
        x = x_ref[...].astype(jnp.float32)
        y = y_ref[...].astype(jnp.float32)
        d = x - y
        d2 = d * d
        y2 = y * y
        if masked:
            # Zero out rows past the true extent in the partial last block.
            row_idx = (i * block_rows
                       + jax.lax.broadcasted_iota(jnp.int32, (block_rows, 1), 0))
            valid = row_idx < rows
            d2 = jnp.where(valid, d2, 0.0)
            y2 = jnp.where(valid, y2, 0.0)
        # (block_rows, 128) -> (block_rows//8, 8, 128) is tile-preserving;
        # the leading-axis sum is pure VALU accumulation into one vreg pair.
        acc_err[...] += d2.reshape(-1, SUBLANES, LANES).sum(axis=0)
        acc_y[...] += y2.reshape(-1, SUBLANES, LANES).sum(axis=0)

    if needs_mask:
        @pl.when(i != last)
        def _():
            _accumulate(masked=False)

        @pl.when(i == last)
        def _():
            _accumulate(masked=True)
    else:
        _accumulate(masked=False)

    @pl.when(i == last)
    def _():
        mse = jnp.sum(acc_err[...]) * inv_n
        mean_y2 = jnp.sum(acc_y[...]) * inv_n
        loss_ref[0] = jnp.sqrt(mse + eps) / jnp.sqrt(mean_y2)


@functools.partial(jax.jit, static_argnames=("eps",))
def nrmse_loss(x, y, eps=1e-6):
    """NRMSE loss: sqrt(mse(x, y) + eps) / sqrt(mean(y**2))."""
    assert x.shape == y.shape, "x and y must have the same shape"
    n = x.size  # true element count for the means (static under jit)

    xf = x.reshape(-1)
    yf = y.reshape(-1)

    # Lane alignment: pad only when n is not a multiple of 128 (never hit for
    # the NCHW demo case). Zero padding contributes nothing to either sum.
    if n % LANES != 0:
        pad = LANES - n % LANES
        xf = jnp.pad(xf, (0, pad))
        yf = jnp.pad(yf, (0, pad))

    rows = xf.size // LANES
    x2d = xf.reshape(rows, LANES)
    y2d = yf.reshape(rows, LANES)

    itemsize = jnp.dtype(x.dtype).itemsize
    max_block_rows = MAX_BLOCK_BYTES // (LANES * itemsize)
    max_block_rows = max(SUBLANES, (max_block_rows // SUBLANES) * SUBLANES)

    cost = pl.CostEstimate(
        flops=5 * n,
        transcendentals=2,
        bytes_accessed=n * (jnp.dtype(x.dtype).itemsize
                            + jnp.dtype(y.dtype).itemsize),
    )
    cparams = pltpu.CompilerParams(
        dimension_semantics=("arbitrary",),   # sequential reduction axis
        vmem_limit_bytes=VMEM_LIMIT_BYTES,
    )

    if rows <= max_block_rows:
        # Single-step fast path: no scratch, no accumulator RMW.
        kernel = functools.partial(
            _nrmse_single_kernel, inv_n=1.0 / n, eps=float(eps))
        sums = pl.pallas_call(
            kernel,
            out_shape=jax.ShapeDtypeStruct((1,), jnp.float32),
            grid_spec=pltpu.PrefetchScalarGridSpec(
                num_scalar_prefetch=0,
                grid=(1,),
                in_specs=[
                    pl.BlockSpec((rows, LANES), lambda i: (0, 0)),
                    pl.BlockSpec((rows, LANES), lambda i: (0, 0)),
                ],
                out_specs=pl.BlockSpec(memory_space=pltpu.SMEM),
            ),
            compiler_params=cparams,
            cost_estimate=cost,
        )(x2d, y2d)
        return sums[0]

    # Streaming path: 8 MiB-per-input blocks, (8, 128) partial accumulators.
    block_rows = max_block_rows
    grid_steps = pl.cdiv(rows, block_rows)
    needs_mask = rows % block_rows != 0

    kernel = functools.partial(
        _nrmse_stream_kernel,
        rows=rows,
        block_rows=block_rows,
        inv_n=1.0 / n,
        eps=float(eps),
        needs_mask=needs_mask,
    )
    sums = pl.pallas_call(
        kernel,
        out_shape=jax.ShapeDtypeStruct((1,), jnp.float32),
        grid_spec=pltpu.PrefetchScalarGridSpec(
            num_scalar_prefetch=0,
            grid=(grid_steps,),
            in_specs=[
                pl.BlockSpec((block_rows, LANES), lambda i: (i, 0)),
                pl.BlockSpec((block_rows, LANES), lambda i: (i, 0)),
            ],
            out_specs=pl.BlockSpec(memory_space=pltpu.SMEM),
            scratch_shapes=[
                pltpu.VMEM((SUBLANES, LANES), jnp.float32),
                pltpu.VMEM((SUBLANES, LANES), jnp.float32),
            ],
        ),
        compiler_params=cparams,
        cost_estimate=cost,
    )(x2d, y2d)
    return sums[0]


if __name__ == "__main__":
    key = jax.random.PRNGKey(0)
    kx, ky, kx2, ky2 = jax.random.split(key, 4)

    # Small NCHW inputs matching the PyTorch module usage (single-step path).
    x = jax.random.normal(kx, (2, 4, 16, 16), dtype=jnp.float32)
    y = jax.random.normal(ky, (2, 4, 16, 16), dtype=jnp.float32)

    loss = nrmse_loss(x, y, eps=1e-6)
    loss = jax.block_until_ready(loss)

    ref = jnp.sqrt(jnp.mean((x - y) ** 2) + 1e-6) / jnp.sqrt(jnp.mean(y ** 2))
    assert jnp.allclose(loss, ref, rtol=1e-5, atol=1e-6), (loss, ref)

    # Larger input exercising the streaming path (2 grid steps, masked tail).
    xb = jax.random.normal(kx2, (4, 8, 260, 260), dtype=jnp.float32)
    yb = jax.random.normal(ky2, (4, 8, 260, 260), dtype=jnp.float32)

    loss_b = nrmse_loss(xb, yb, eps=1e-6)
    loss_b = jax.block_until_ready(loss_b)

    ref_b = (jnp.sqrt(jnp.mean((xb - yb) ** 2) + 1e-6)
             / jnp.sqrt(jnp.mean(yb ** 2)))
    assert jnp.allclose(loss_b, ref_b, rtol=1e-5, atol=1e-6), (loss_b, ref_b)

    print("KERNEL_OK")
</pallas_src>

<mosaic_0001>
module attributes {stable_mosaic.version = 11 : i64} {
  func.func @_nrmse_single_kernel(%arg0: i32, %arg1: memref<16x128xf32, #tpu.memory_space<vmem>>, %arg2: memref<16x128xf32, #tpu.memory_space<vmem>>, %arg3: memref<1xf32, #tpu.memory_space<smem>>) attributes {dimension_semantics = [#tpu.dimension_semantics<arbitrary>], iteration_bounds = array<i64: 1>, scalar_prefetch = 0 : i64, scratch_operands = 0 : i64, tpu.core_type = #tpu.core_type<tc>, window_params = [{pipeline_mode = #tpu.pipeline_mode<synchronous>, transform_indices = @transform_0, window_bounds = array<i64: 16, 128>}, {pipeline_mode = #tpu.pipeline_mode<synchronous>, transform_indices = @transform_1, window_bounds = array<i64: 16, 128>}, {transform_indices = @transform_2, window_bounds = array<i64: 1>}]} {
    %c0 = arith.constant 0 : index
    %c0_0 = arith.constant 0 : index
    %0 = vector.load %arg1[%c0, %c0_0] : memref<16x128xf32, #tpu.memory_space<vmem>>, vector<16x128xf32>
    %c0_1 = arith.constant 0 : index
    %c0_2 = arith.constant 0 : index
    %1 = vector.load %arg2[%c0_1, %c0_2] : memref<16x128xf32, #tpu.memory_space<vmem>>, vector<16x128xf32>
    %2 = arith.subf %0, %1 : vector<16x128xf32>
    %3 = arith.mulf %2, %2 : vector<16x128xf32>
    %4 = vector.shape_cast %3 : vector<16x128xf32> to vector<1x16x128xf32>
    %cst = arith.constant dense<0.000000e+00> : vector<1xf32>
    %5 = vector.multi_reduction <add>, %4, %cst [1, 2] : vector<1x16x128xf32> to vector<1xf32>
    %6 = vector.shape_cast %5 : vector<1xf32> to vector<1x1x1xf32>
    %7 = vector.extract %6[0, 0, 0] : f32 from vector<1x1x1xf32>
    %cst_3 = arith.constant 4.8828125E-4 : f32
    %8 = arith.mulf %7, %cst_3 : f32
    %9 = arith.mulf %1, %1 : vector<16x128xf32>
    %10 = vector.shape_cast %9 : vector<16x128xf32> to vector<1x16x128xf32>
    %cst_4 = arith.constant dense<0.000000e+00> : vector<1xf32>
    %11 = vector.multi_reduction <add>, %10, %cst_4 [1, 2] : vector<1x16x128xf32> to vector<1xf32>
    %12 = vector.shape_cast %11 : vector<1xf32> to vector<1x1x1xf32>
    %13 = vector.extract %12[0, 0, 0] : f32 from vector<1x1x1xf32>
    %cst_5 = arith.constant 4.8828125E-4 : f32
    %14 = arith.mulf %13, %cst_5 : f32
    %cst_6 = arith.constant 9.99999997E-7 : f32
    %15 = arith.addf %8, %cst_6 : f32
    %16 = math.sqrt %15 : f32
    %17 = math.sqrt %14 : f32
    %18 = arith.divf %16, %17 : f32
    %c0_7 = arith.constant 0 : index
    %19 = memref.load %arg3[%c0_7] : memref<1xf32, #tpu.memory_space<smem>>
    memref.store %18, %arg3[%c0_7] : memref<1xf32, #tpu.memory_space<smem>>
    return
  }
  func.func @transform_0(%arg0: i32) -> (i32, i32) {
    %c0_i32 = arith.constant 0 : i32
    %c0_i32_0 = arith.constant 0 : i32
    %c0_i32_1 = arith.constant 0 : i32
    return %c0_i32, %c0_i32_0 : i32, i32
  }
  func.func @transform_1(%arg0: i32) -> (i32, i32) {
    %c0_i32 = arith.constant 0 : i32
    %c0_i32_0 = arith.constant 0 : i32
    %c0_i32_1 = arith.constant 0 : i32
    return %c0_i32, %c0_i32_0 : i32, i32
  }
  func.func @transform_2(%arg0: i32) -> i32 {
    %c0_i32 = arith.constant 0 : i32
    %c0_i32_0 = arith.constant 0 : i32
    return %c0_i32 : i32
  }
}

</mosaic_0001>

<llo_original>
// kernel: nrmse_loss.1
$region0: #{nrmse_loss.1}
  #allocation0 [shape = 'u32[]', space=smem, size = 0x4, offset = 0x4, fixed_abs, tag = 'smem constant byte address 0x4 - core index']
  #allocation1 [shape = 'u32[144,128]{1,0:T(1,128)}', space=vmem, size = 0x12000, scoped, tag = 'internal scratch']
  %s0 = inlined_call_operand.vmem [shape: f32[16,128], index: 0, kind: input, shape index: {}]
  %s1 = inlined_call_operand.vmem [shape: f32[16,128], index: 1, kind: input, shape index: {}]
  %s2 = inlined_call_operand.hbm [shape: f32[1], index: 2, kind: output, shape index: {}]
  %s3 = sld [smem:[#allocation0]]
  $region18: #{nrmse_loss.1} parent=0
    _
  %s5 = ssub.s32 1, %s3
  %s6 = scalar_select 0, %s5, %s3
  $region1: #{nrmse_loss.1} parent=0
    #allocation2 [shape = 'u8[512]{0}', space=smem, size = 0x200, scoped, tag = 'output window, operand 0, single buffered']
    #allocation3 [shape = 's32[1]{0}', space=sflag, size = 0x4, scoped, tag = 'scoped memory for nrmse_loss.1']
    %7 = vsyncpa [#allocation3], 0
    // Predicated region
    $region2: #{nrmse_loss.1} parent=1 // pred_check
      _
    $region3: #{nrmse_loss.1} parent=1 // pred_check_branch
      %9 = sbr.rel (0) target = $region5
    $region4: #{nrmse_loss.1} parent=1 // pred_region
      _
    $region5: #{nrmse_loss.1} parent=1 // pred_fallthru
      _
    // Predicated region
    $region6: #{nrmse_loss.1} parent=1 // pred_check
      _
    $region7: #{nrmse_loss.1} parent=1 // pred_check_branch
      %11 = sbr.rel (0) target = $region9
    $region8: #{nrmse_loss.1} parent=1 // pred_region
      _
    $region9: #{nrmse_loss.1} parent=1 // pred_fallthru
      _
    %v12 = vld [vmem:[%s0] sm:$0xff]
    %v13 = vld [vmem:[%s0 + $0x8] sm:$0xff]
    %v14 = vld [vmem:[%s1] sm:$0xff]
    %v15 = vld [vmem:[%s1 + $0x8] sm:$0xff]
    %v16 = vsub.f32 %v12, %v14
    %v17 = vsub.f32 %v13, %v15
    %v18 = vmul.f32 %v16, %v16
    %v19 = vmul.f32 %v17, %v17
    %v20 = vadd.f32 %v18, %v19
    %21 = vadd.xlane.f32.xlu0 %v20
    %v22 = vpop.xlane.xlu0 %21
    %v23 = vrot.slane %v22, 4
    %v24 = vadd.f32 %v22, %v23
    %v25 = vrot.slane %v24, 2
    %v26 = vadd.f32 %v24, %v25
    %v27 = vrot.slane %v26, 1
    %v28 = vadd.f32 %v26, %v27
    %s29 = vtos %v28
    %s30 = smul.f32 %s29, 0.00048828125
    %v31 = vmul.f32 %v14, %v14
    %v32 = vmul.f32 %v15, %v15
    %v33 = vadd.f32 %v31, %v32
    %34 = vadd.xlane.f32.xlu0 %v33
    %v35 = vpop.xlane.xlu0 %34
    %v36 = vrot.slane %v35, 4
    %v37 = vadd.f32 %v35, %v36
    %v38 = vrot.slane %v37, 2
    %v39 = vadd.f32 %v37, %v38
    %v40 = vrot.slane %v39, 1
    %v41 = vadd.f32 %v39, %v40
    %s42 = vtos %v41
    %s43 = smul.f32 %s42, 0.00048828125
    %s44 = sadd.f32 %s30, 1e-06
    %v45 = vstv %s44
    %v46 = vrsqrt.pop %v45
    %v47 = vmul.f32 %v45, %v46
    %vm48 = vcmp.eq.f32.partialorder %v45, inf
    %v49 = vsel %vm48, %v45, %v47
    %vm50 = vcmp.eq.f32.partialorder %v45, 0.0
    %v51 = vand.u32 %v45, 2147483648
    %v52 = vsel %vm50, %v51, %v49
    %s53 = vtos %v52
    %v54 = vstv %s43
    %v55 = vrsqrt.pop %v54
    %v56 = vmul.f32 %v54, %v55
    %vm57 = vcmp.eq.f32.partialorder %v54, inf
    %v58 = vsel %vm57, %v54, %v56
    %vm59 = vcmp.eq.f32.partialorder %v54, 0.0
    %v60 = vand.u32 %v54, 2147483648
    %v61 = vsel %vm59, %v60, %v58
    %s62 = vtos %v61
    %v63 = vstv %s62
    %v64 = vrcp.pop %v63
    %s65 = vtos %v64
    %s66 = smul.f32 %s53, %s65
    %s67 = scalar_lea.smem [#allocation2], 0
    %68 = sst [smem:[%s67]] %s66
    // Predicated region
    $region10: #{nrmse_loss.1} parent=1 // pred_check
      _
    $region11: #{nrmse_loss.1} parent=1 // pred_check_branch
      %70 = sbr.rel (0) target = $region13
    $region12: #{nrmse_loss.1} parent=1 // pred_region
      %s72 = ssub.s32 16, 16
      %73 = vsyncadd [#allocation3], %s72
      %76 = dma.smem_to_hbm [#allocation2], 16, %s2, [#allocation3]
    $region13: #{nrmse_loss.1} parent=1 // pred_fallthru
      _
    // Predicated region
    $region14: #{nrmse_loss.1} parent=1 // pred_check
      _
    $region15: #{nrmse_loss.1} parent=1 // pred_check_branch
      %78 = sbr.rel (0) target = $region17
    $region16: #{nrmse_loss.1} parent=1 // pred_region
      %79 = dma.done [#allocation3], 16
    $region17: #{nrmse_loss.1} parent=1 // pred_fallthru
      _
    %80 = sfence
    %81 = vsyncpa [#allocation3], 1

</llo_original>
